<compile_context>
chip_gen: v5e
topology: v5e:2x2
jax: 0.10.0
libtpu: 0.0.40
codegen_flags: <defaults>
</compile_context>

<pallas_src>
import math
import jax
import jax.numpy as jnp
from jax.experimental import pallas as pl
from jax.experimental.pallas import tpu as pltpu


# ----------------------------------------------------------------------------
# Single-invocation kernel.
#   x_ref : (T*Bp, I)  time-major, flattened over (t, b), Bp = pad8(B)
#   p_ref : (H+I+2+O, H)  packed parameter slab (layout above)
#   o_ref : (Bp, O)
# ----------------------------------------------------------------------------
def rnn_kernel(x_ref, p_ref, o_ref):
    TB, I = x_ref.shape
    H = p_ref.shape[1]
    Bp, O = o_ref.shape
    T = TB // Bp

    # Static row offsets into the packed slab.
    r_whh = 0
    r_wih = H
    r_bias = H + I
    r_wfc = H + I + 1
    r_bfc = H + I + 1 + O

    x = x_ref[...]                                   # (T*Bp, I)
    bias = p_ref[r_bias:r_bias + 1, :]               # (1, H)

    # Hoisted input projection for all time steps at once.
    if I == 1:
        # Degenerate K=1 matmul -> VPU broadcast multiply-add (no MXU pass).
        xw = x * p_ref[r_wih:r_wih + 1, :] + bias            # (T*Bp, H)
    else:
        xw = jnp.dot(x, p_ref[r_wih:r_wih + I, :],
                     preferred_element_type=jnp.float32) + bias

    whh = p_ref[r_whh:r_whh + H, :]                  # (H, H), loaded once

    # Recurrence: h carried in vregs; fully unrolled (T small & static).
    h = jnp.zeros((Bp, H), jnp.float32)              # initHidden -> zeros
    for t in range(T):
        h = jnp.tanh(xw[t * Bp:(t + 1) * Bp, :]
                     + jnp.dot(h, whh, preferred_element_type=jnp.float32))

    # fc applied once on the final hidden state == pred[-1].
    wfcT = p_ref[r_wfc:r_wfc + O, :]                 # (O, H)
    bfc = p_ref[r_bfc:r_bfc + 1, 0:O]                # (1, O)
    if O == 1:
        # Degenerate N=1 matmul -> VPU multiply + lane reduce.
        y = jnp.sum(h * wfcT, axis=-1, keepdims=True) + bfc
    else:
        y = jnp.dot(h, wfcT.T, preferred_element_type=jnp.float32) + bfc
    o_ref[...] = y.astype(o_ref.dtype)


# ----------------------------------------------------------------------------
# Wrapper: pad batch to a sublane multiple, pack params, slice real rows back.
# ----------------------------------------------------------------------------
def pack_params(params):
    w_ih, w_hh, b_ih, b_hh, w_fc, b_fc = params
    I, H = w_ih.shape
    O = w_fc.shape[1]
    bias = (b_ih + b_hh).reshape(1, H)
    wfcT = w_fc.T                                   # (O, H)
    bfc_row = jnp.zeros((1, H), jnp.float32).at[0, :O].set(b_fc.reshape(-1))
    slab = jnp.concatenate(
        [w_hh, w_ih, bias, wfcT, bfc_row], axis=0).astype(jnp.float32)
    return slab                                      # (H + I + 2 + O, H)


def rnn_forward_pallas(x, slab):
    """x: (T, B, I) float32, slab: packed params.  Returns (B, O) == pred[-1]."""
    T, B, I = x.shape
    H = slab.shape[1]
    O = slab.shape[0] - H - I - 2

    Bp = ((B + 7) // 8) * 8                          # pad batch to sublane mult
    if Bp != B:
        x = jnp.pad(x, ((0, 0), (0, Bp - B), (0, 0)))
    x2d = jnp.reshape(x, (T * Bp, I))                # row t*Bp + b == (t, b)

    out = pl.pallas_call(
        rnn_kernel,
        out_shape=jax.ShapeDtypeStruct((Bp, O), jnp.float32),
        in_specs=[pl.BlockSpec(memory_space=pltpu.MemorySpace.VMEM),
                  pl.BlockSpec(memory_space=pltpu.MemorySpace.VMEM)],
        out_specs=pl.BlockSpec(memory_space=pltpu.MemorySpace.VMEM),
    )(x2d, slab)

    return out[:B]                                   # drop padded garbage rows


# ----------------------------------------------------------------------------
# Module wrapper reproducing RNNs.forward() semantics.
# ----------------------------------------------------------------------------
def rnns_forward(seq, params, input_size=1):
    # seq.view(len(seq[0]), -1, input_size)  ==  row-major reshape
    T = seq.shape[1]
    x = jnp.reshape(seq, (T, -1, input_size)).astype(jnp.float32)
    slab = pack_params(params)
    return rnn_forward_pallas(x, slab)
    # TODO(synk): the stateful self.hidden carried across forward() calls is
    # not modeled; h0 = zeros (initHidden) every call.


def init_params(key, input_size=1, hidden_size=32, output_size=1):
    # PyTorch default init: U(-1/sqrt(H), 1/sqrt(H)) for nn.RNN and nn.Linear.
    k_rnn = 1.0 / math.sqrt(hidden_size)
    k_fc = 1.0 / math.sqrt(hidden_size)
    ks = jax.random.split(key, 6)
    w_ih = jax.random.uniform(ks[0], (input_size, hidden_size), jnp.float32, -k_rnn, k_rnn)
    w_hh = jax.random.uniform(ks[1], (hidden_size, hidden_size), jnp.float32, -k_rnn, k_rnn)
    b_ih = jax.random.uniform(ks[2], (1, hidden_size), jnp.float32, -k_rnn, k_rnn)
    b_hh = jax.random.uniform(ks[3], (1, hidden_size), jnp.float32, -k_rnn, k_rnn)
    w_fc = jax.random.uniform(ks[4], (hidden_size, output_size), jnp.float32, -k_fc, k_fc)
    b_fc = jax.random.uniform(ks[5], (1, output_size), jnp.float32, -k_fc, k_fc)
    return (w_ih, w_hh, b_ih, b_hh, w_fc, b_fc)


def rnns_forward_ref(seq, params, input_size=1):
    """Pure-JAX reference for validation."""
    w_ih, w_hh, b_ih, b_hh, w_fc, b_fc = params
    T = seq.shape[1]
    x = jnp.reshape(seq, (T, -1, input_size)).astype(jnp.float32)
    B = x.shape[1]
    h = jnp.zeros((B, w_hh.shape[0]), jnp.float32)
    for t in range(T):
        h = jnp.tanh(x[t] @ w_ih + h @ w_hh + b_ih + b_hh)
    return h @ w_fc + b_fc


if __name__ == "__main__":
    key = jax.random.PRNGKey(0)
    kp, kx = jax.random.split(key)

    input_size, hidden_size, output_size = 1, 32, 1
    batch, seq_len = 4, 8

    params = init_params(kp, input_size, hidden_size, output_size)
    # seq: (batch, seq_len) -> forward views it as (seq_len, batch, 1)
    seq = jax.random.normal(kx, (batch, seq_len), jnp.float32)

    out = rnns_forward(seq, params, input_size)
    out = jax.block_until_ready(out)

    ref = rnns_forward_ref(seq, params, input_size)
    assert out.shape == (batch, output_size), out.shape
    assert jnp.allclose(out, ref, atol=1e-5, rtol=1e-5), (out, ref)

    print("KERNEL_OK")
</pallas_src>

<mosaic_0001>
module attributes {stable_mosaic.version = 11 : i64} {
  func.func @rnn_kernel(%arg0: memref<64x1xf32, #tpu.memory_space<vmem>>, %arg1: memref<36x32xf32, #tpu.memory_space<vmem>>, %arg2: memref<8x1xf32, #tpu.memory_space<vmem>>) attributes {dimension_semantics = [], scalar_prefetch = 0 : i64, scratch_operands = 0 : i64, tpu.core_type = #tpu.core_type<tc>} {
    %c0 = arith.constant 0 : index
    %c0_0 = arith.constant 0 : index
    %0 = vector.load %arg0[%c0, %c0_0] : memref<64x1xf32, #tpu.memory_space<vmem>>, vector<64x1xf32>
    %c33 = arith.constant 33 : index
    %c0_1 = arith.constant 0 : index
    %1 = vector.load %arg1[%c33, %c0_1] : memref<36x32xf32, #tpu.memory_space<vmem>>, vector<1x32xf32>
    %c32 = arith.constant 32 : index
    %c0_2 = arith.constant 0 : index
    %2 = vector.load %arg1[%c32, %c0_2] : memref<36x32xf32, #tpu.memory_space<vmem>>, vector<1x32xf32>
    %3 = vector.broadcast %0 : vector<64x1xf32> to vector<64x32xf32>
    %4 = vector.broadcast %2 : vector<1x32xf32> to vector<64x32xf32>
    %5 = arith.mulf %3, %4 : vector<64x32xf32>
    %6 = vector.broadcast %1 : vector<1x32xf32> to vector<64x32xf32>
    %7 = arith.addf %5, %6 : vector<64x32xf32>
    %c0_3 = arith.constant 0 : index
    %c0_4 = arith.constant 0 : index
    %8 = vector.load %arg1[%c0_3, %c0_4] : memref<36x32xf32, #tpu.memory_space<vmem>>, vector<32x32xf32>
    %cst = arith.constant 0.000000e+00 : f32
    %9 = vector.broadcast %cst : f32 to vector<8x32xf32>
    %10 = vector.extract_strided_slice %7 {offsets = [0, 0], sizes = [8, 32], strides = [1, 1]} : vector<64x32xf32> to vector<8x32xf32>
    %cst_5 = arith.constant dense<0.000000e+00> : vector<8x32xf32>
    %11 = tpu.matmul %9, %8, %cst_5 {dimension_numbers = #tpu.dot_dimension_numbers<[1], [0], [0], [1], [0, 0, 1, 1], [], []>} : vector<8x32xf32>, vector<32x32xf32>, vector<8x32xf32> -> vector<8x32xf32>
    %12 = arith.addf %10, %11 : vector<8x32xf32>
    %13 = math.tanh %12 : vector<8x32xf32>
    %14 = vector.extract_strided_slice %7 {offsets = [8, 0], sizes = [8, 32], strides = [1, 1]} : vector<64x32xf32> to vector<8x32xf32>
    %cst_6 = arith.constant dense<0.000000e+00> : vector<8x32xf32>
    %15 = tpu.matmul %13, %8, %cst_6 {dimension_numbers = #tpu.dot_dimension_numbers<[1], [0], [0], [1], [0, 0, 1, 1], [], []>} : vector<8x32xf32>, vector<32x32xf32>, vector<8x32xf32> -> vector<8x32xf32>
    %16 = arith.addf %14, %15 : vector<8x32xf32>
    %17 = math.tanh %16 : vector<8x32xf32>
    %18 = vector.extract_strided_slice %7 {offsets = [16, 0], sizes = [8, 32], strides = [1, 1]} : vector<64x32xf32> to vector<8x32xf32>
    %cst_7 = arith.constant dense<0.000000e+00> : vector<8x32xf32>
    %19 = tpu.matmul %17, %8, %cst_7 {dimension_numbers = #tpu.dot_dimension_numbers<[1], [0], [0], [1], [0, 0, 1, 1], [], []>} : vector<8x32xf32>, vector<32x32xf32>, vector<8x32xf32> -> vector<8x32xf32>
    %20 = arith.addf %18, %19 : vector<8x32xf32>
    %21 = math.tanh %20 : vector<8x32xf32>
    %22 = vector.extract_strided_slice %7 {offsets = [24, 0], sizes = [8, 32], strides = [1, 1]} : vector<64x32xf32> to vector<8x32xf32>
    %cst_8 = arith.constant dense<0.000000e+00> : vector<8x32xf32>
    %23 = tpu.matmul %21, %8, %cst_8 {dimension_numbers = #tpu.dot_dimension_numbers<[1], [0], [0], [1], [0, 0, 1, 1], [], []>} : vector<8x32xf32>, vector<32x32xf32>, vector<8x32xf32> -> vector<8x32xf32>
    %24 = arith.addf %22, %23 : vector<8x32xf32>
    %25 = math.tanh %24 : vector<8x32xf32>
    %26 = vector.extract_strided_slice %7 {offsets = [32, 0], sizes = [8, 32], strides = [1, 1]} : vector<64x32xf32> to vector<8x32xf32>
    %cst_9 = arith.constant dense<0.000000e+00> : vector<8x32xf32>
    %27 = tpu.matmul %25, %8, %cst_9 {dimension_numbers = #tpu.dot_dimension_numbers<[1], [0], [0], [1], [0, 0, 1, 1], [], []>} : vector<8x32xf32>, vector<32x32xf32>, vector<8x32xf32> -> vector<8x32xf32>
    %28 = arith.addf %26, %27 : vector<8x32xf32>
    %29 = math.tanh %28 : vector<8x32xf32>
    %30 = vector.extract_strided_slice %7 {offsets = [40, 0], sizes = [8, 32], strides = [1, 1]} : vector<64x32xf32> to vector<8x32xf32>
    %cst_10 = arith.constant dense<0.000000e+00> : vector<8x32xf32>
    %31 = tpu.matmul %29, %8, %cst_10 {dimension_numbers = #tpu.dot_dimension_numbers<[1], [0], [0], [1], [0, 0, 1, 1], [], []>} : vector<8x32xf32>, vector<32x32xf32>, vector<8x32xf32> -> vector<8x32xf32>
    %32 = arith.addf %30, %31 : vector<8x32xf32>
    %33 = math.tanh %32 : vector<8x32xf32>
    %34 = vector.extract_strided_slice %7 {offsets = [48, 0], sizes = [8, 32], strides = [1, 1]} : vector<64x32xf32> to vector<8x32xf32>
    %cst_11 = arith.constant dense<0.000000e+00> : vector<8x32xf32>
    %35 = tpu.matmul %33, %8, %cst_11 {dimension_numbers = #tpu.dot_dimension_numbers<[1], [0], [0], [1], [0, 0, 1, 1], [], []>} : vector<8x32xf32>, vector<32x32xf32>, vector<8x32xf32> -> vector<8x32xf32>
    %36 = arith.addf %34, %35 : vector<8x32xf32>
    %37 = math.tanh %36 : vector<8x32xf32>
    %38 = vector.extract_strided_slice %7 {offsets = [56, 0], sizes = [8, 32], strides = [1, 1]} : vector<64x32xf32> to vector<8x32xf32>
    %cst_12 = arith.constant dense<0.000000e+00> : vector<8x32xf32>
    %39 = tpu.matmul %37, %8, %cst_12 {dimension_numbers = #tpu.dot_dimension_numbers<[1], [0], [0], [1], [0, 0, 1, 1], [], []>} : vector<8x32xf32>, vector<32x32xf32>, vector<8x32xf32> -> vector<8x32xf32>
    %40 = arith.addf %38, %39 : vector<8x32xf32>
    %41 = math.tanh %40 : vector<8x32xf32>
    %c34 = arith.constant 34 : index
    %c0_13 = arith.constant 0 : index
    %42 = vector.load %arg1[%c34, %c0_13] : memref<36x32xf32, #tpu.memory_space<vmem>>, vector<1x32xf32>
    %c35 = arith.constant 35 : index
    %c0_14 = arith.constant 0 : index
    %43 = vector.load %arg1[%c35, %c0_14] : memref<36x32xf32, #tpu.memory_space<vmem>>, vector<1x1xf32>
    %44 = vector.broadcast %42 : vector<1x32xf32> to vector<8x32xf32>
    %45 = arith.mulf %41, %44 : vector<8x32xf32>
    %cst_15 = arith.constant dense<0.000000e+00> : vector<8xf32>
    %46 = vector.multi_reduction <add>, %45, %cst_15 [1] : vector<8x32xf32> to vector<8xf32>
    %47 = vector.shape_cast %46 : vector<8xf32> to vector<8x1xf32>
    %48 = vector.broadcast %43 : vector<1x1xf32> to vector<8x1xf32>
    %49 = arith.addf %47, %48 : vector<8x1xf32>
    %c0_16 = arith.constant 0 : index
    %c0_17 = arith.constant 0 : index
    %50 = vector.load %arg2[%c0_16, %c0_17] : memref<8x1xf32, #tpu.memory_space<vmem>>, vector<8x1xf32>
    tpu.vector_store %arg2[%c0_16, %c0_17], %49 {strides = array<i32>} : memref<8x1xf32, #tpu.memory_space<vmem>>, vector<8x1xf32>,
    return
  }
}

</mosaic_0001>

<llo_original>
// kernel: tpu_custom_call.1
$region0: #{tpu_custom_call.1}
  #allocation0 [shape = 'u32[]', space=smem, size = 0x4, offset = 0x4, fixed_abs, tag = 'smem constant byte address 0x4 - core index']
  #allocation1 [shape = 'u32[72,128]{1,0:T(1,128)}', space=vmem, size = 0x9000, scoped, tag = 'internal scratch']
  %s0 = inlined_call_operand.vmem [shape: f32[64,1], index: 0, kind: input, shape index: {}]
  %s1 = inlined_call_operand.vmem [shape: f32[36,32], index: 1, kind: input, shape index: {}]
  %s2 = inlined_call_operand.vmem [shape: f32[8,1], index: 2, kind: output, shape index: {}]
  %s3 = sld [smem:[#allocation0]]
  $region18: #{tpu_custom_call.1} parent=0
    _
  %s5 = ssub.s32 1, %s3
  %s6 = scalar_select 0, %s5, %s3
  // Predicated region
  $region2: #{tpu_custom_call.1} parent=0 // pred_check
    _
  $region3: #{tpu_custom_call.1} parent=0 // pred_check_branch
    %8 = sbr.rel (0) target = $region5
  $region4: #{tpu_custom_call.1} parent=0 // pred_region
    _
  $region5: #{tpu_custom_call.1} parent=0 // pred_fallthru
    _
  // Predicated region
  $region6: #{tpu_custom_call.1} parent=0 // pred_check
    _
  $region7: #{tpu_custom_call.1} parent=0 // pred_check_branch
    %10 = sbr.rel (0) target = $region9
  $region8: #{tpu_custom_call.1} parent=0 // pred_region
    _
  $region9: #{tpu_custom_call.1} parent=0 // pred_fallthru
    _
  %v11 = vld [vmem:[%s0] sm:$0xff]
  %v12 = vld [vmem:[%s0 + $0x8] sm:$0xff]
  %v13 = vld [vmem:[%s0 + $0x10] sm:$0xff]
  %v14 = vld [vmem:[%s0 + $0x18] sm:$0xff]
  %v15 = vld [vmem:[%s0 + $0x20] sm:$0xff]
  %v16 = vld [vmem:[%s0 + $0x28] sm:$0xff]
  %v17 = vld [vmem:[%s0 + $0x30] sm:$0xff]
  %v18 = vld [vmem:[%s0 + $0x38] sm:$0xff]
  %v19 = vld [vmem:[%s1 + $0x21] sm:$0x1]
  %v20 = vld [vmem:[%s1 + $0x20] sm:$0x1]
  %22 = vset.pattern.permute.xlu0 0
  %23 = vperm.xlu0 %22, %v11
  %v24 = vpop.permute.xlu0 %23
  %27 = vset.pattern.permute.xlu0 0
  %28 = vperm.xlu0 %27, %v12
  %v29 = vpop.permute.xlu0 %28
  %32 = vset.pattern.permute.xlu0 0
  %33 = vperm.xlu0 %32, %v13
  %v34 = vpop.permute.xlu0 %33
  %37 = vset.pattern.permute.xlu0 0
  %38 = vperm.xlu0 %37, %v14
  %v39 = vpop.permute.xlu0 %38
  %42 = vset.pattern.permute.xlu0 0
  %43 = vperm.xlu0 %42, %v15
  %v44 = vpop.permute.xlu0 %43
  %47 = vset.pattern.permute.xlu0 0
  %48 = vperm.xlu0 %47, %v16
  %v49 = vpop.permute.xlu0 %48
  %52 = vset.pattern.permute.xlu0 0
  %53 = vperm.xlu0 %52, %v17
  %v54 = vpop.permute.xlu0 %53
  %57 = vset.pattern.permute.xlu0 0
  %58 = vperm.xlu0 %57, %v18
  %v59 = vpop.permute.xlu0 %58
  %v61 = vperm.slane %v20, 0
  %v62 = vmul.f32 %v24, %v61
  %v63 = vmul.f32 %v29, %v61
  %v64 = vmul.f32 %v34, %v61
  %v65 = vmul.f32 %v39, %v61
  %v66 = vmul.f32 %v44, %v61
  %v67 = vmul.f32 %v49, %v61
  %v68 = vmul.f32 %v54, %v61
  %v69 = vmul.f32 %v59, %v61
  %v70 = vperm.slane %v19, 0
  %v71 = vadd.f32 %v62, %v70
  %v72 = vadd.f32 %v63, %v70
  %v73 = vadd.f32 %v64, %v70
  %v74 = vadd.f32 %v65, %v70
  %v75 = vadd.f32 %v66, %v70
  %v76 = vadd.f32 %v67, %v70
  %v77 = vadd.f32 %v68, %v70
  %v78 = vadd.f32 %v69, %v70
  %v79 = vld [vmem:[%s1] sm:$0xff]
  %v80 = vld [vmem:[%s1 + $0x8] sm:$0xff]
  %v81 = vld [vmem:[%s1 + $0x10] sm:$0xff]
  %v82 = vld [vmem:[%s1 + $0x18] sm:$0xff]
  %vm83 = vcmask 261120
  %v85 = vsel %vm83, 0.0, 0
  %87 = vmatpush.msra.mxu0 0.0
  %88 = vmatpush.msra.mxu0 0.0
  %89 = vmatpush.msra.mxu0 0.0
  %90 = vmatpush.msra.mxu0 0.0
  %91 = vmatpush.msra.mxu0 0.0
  %92 = vmatpush.msra.mxu0 0.0
  %93 = vmatpush.msra.mxu0 0.0
  %94 = vmatpush.msra.mxu0 0.0
  %95 = vmatpush.msra.mxu0 0.0
  %96 = vmatpush.msra.mxu0 0.0
  %97 = vmatpush.msra.mxu0 0.0
  %98 = vmatpush.msra.mxu0 0.0
  %99 = vmatpush.msra.mxu0 %v82
  %100 = vmatpush.msra.mxu0 %v81
  %101 = vmatpush.msra.mxu0 %v80
  %102 = vmatpush.msra.mxu0 %v79
  %103 = vmatmul.f32.gmra.mxu0 %v85
  %v104 = vpop.f32.mrf.mxu0
  %v105 = vadd.f32 0.0, %v104
  %106 = vdwg.mxu0
  %v107 = vadd.f32 %v71, %v105
  %v108 = vtanh.pop %v107
  %v110 = vsel %vm83, %v108, 0
  %112 = vmatpush.msra.mxu0 0.0
  %113 = vmatpush.msra.mxu0 0.0
  %114 = vmatpush.msra.mxu0 0.0
  %115 = vmatpush.msra.mxu0 0.0
  %116 = vmatpush.msra.mxu0 0.0
  %117 = vmatpush.msra.mxu0 0.0
  %118 = vmatpush.msra.mxu0 0.0
  %119 = vmatpush.msra.mxu0 0.0
  %120 = vmatpush.msra.mxu0 0.0
  %121 = vmatpush.msra.mxu0 0.0
  %122 = vmatpush.msra.mxu0 0.0
  %123 = vmatpush.msra.mxu0 0.0
  %124 = vmatpush.msra.mxu0 %v82
  %125 = vmatpush.msra.mxu0 %v81
  %126 = vmatpush.msra.mxu0 %v80
  %127 = vmatpush.msra.mxu0 %v79
  %128 = vmatmul.f32.gmra.mxu0 %v110
  %v129 = vpop.f32.mrf.mxu0
  %v130 = vadd.f32 0.0, %v129
  %131 = vdwg.mxu0
  %v132 = vadd.f32 %v72, %v130
  %v133 = vtanh.pop %v132
  %v135 = vsel %vm83, %v133, 0
  %137 = vmatpush.msra.mxu0 0.0
  %138 = vmatpush.msra.mxu0 0.0
  %139 = vmatpush.msra.mxu0 0.0
  %140 = vmatpush.msra.mxu0 0.0
  %141 = vmatpush.msra.mxu0 0.0
  %142 = vmatpush.msra.mxu0 0.0
  %143 = vmatpush.msra.mxu0 0.0
  %144 = vmatpush.msra.mxu0 0.0
  %145 = vmatpush.msra.mxu0 0.0
  %146 = vmatpush.msra.mxu0 0.0
  %147 = vmatpush.msra.mxu0 0.0
  %148 = vmatpush.msra.mxu0 0.0
  %149 = vmatpush.msra.mxu0 %v82
  %150 = vmatpush.msra.mxu0 %v81
  %151 = vmatpush.msra.mxu0 %v80
  %152 = vmatpush.msra.mxu0 %v79
  %153 = vmatmul.f32.gmra.mxu0 %v135
  %v154 = vpop.f32.mrf.mxu0
  %v155 = vadd.f32 0.0, %v154
  %156 = vdwg.mxu0
  %v157 = vadd.f32 %v73, %v155
  %v158 = vtanh.pop %v157
  %v160 = vsel %vm83, %v158, 0
  %162 = vmatpush.msra.mxu0 0.0
  %163 = vmatpush.msra.mxu0 0.0
  %164 = vmatpush.msra.mxu0 0.0
  %165 = vmatpush.msra.mxu0 0.0
  %166 = vmatpush.msra.mxu0 0.0
  %167 = vmatpush.msra.mxu0 0.0
  %168 = vmatpush.msra.mxu0 0.0
  %169 = vmatpush.msra.mxu0 0.0
  %170 = vmatpush.msra.mxu0 0.0
  %171 = vmatpush.msra.mxu0 0.0
  %172 = vmatpush.msra.mxu0 0.0
  %173 = vmatpush.msra.mxu0 0.0
  %174 = vmatpush.msra.mxu0 %v82
  %175 = vmatpush.msra.mxu0 %v81
  %176 = vmatpush.msra.mxu0 %v80
  %177 = vmatpush.msra.mxu0 %v79
  %178 = vmatmul.f32.gmra.mxu0 %v160
  %v179 = vpop.f32.mrf.mxu0
  %v180 = vadd.f32 0.0, %v179
  %181 = vdwg.mxu0
  %v182 = vadd.f32 %v74, %v180
  %v183 = vtanh.pop %v182
  %v185 = vsel %vm83, %v183, 0
  %187 = vmatpush.msra.mxu0 0.0
  %188 = vmatpush.msra.mxu0 0.0
  %189 = vmatpush.msra.mxu0 0.0
  %190 = vmatpush.msra.mxu0 0.0
  %191 = vmatpush.msra.mxu0 0.0
  %192 = vmatpush.msra.mxu0 0.0
  %193 = vmatpush.msra.mxu0 0.0
  %194 = vmatpush.msra.mxu0 0.0
  %195 = vmatpush.msra.mxu0 0.0
  %196 = vmatpush.msra.mxu0 0.0
  %197 = vmatpush.msra.mxu0 0.0
  %198 = vmatpush.msra.mxu0 0.0
  %199 = vmatpush.msra.mxu0 %v82
  %200 = vmatpush.msra.mxu0 %v81
  %201 = vmatpush.msra.mxu0 %v80
  %202 = vmatpush.msra.mxu0 %v79
  %203 = vmatmul.f32.gmra.mxu0 %v185
  %v204 = vpop.f32.mrf.mxu0
  %v205 = vadd.f32 0.0, %v204
  %206 = vdwg.mxu0
  %v207 = vadd.f32 %v75, %v205
  %v208 = vtanh.pop %v207
  %v210 = vsel %vm83, %v208, 0
  %212 = vmatpush.msra.mxu0 0.0
  %213 = vmatpush.msra.mxu0 0.0
  %214 = vmatpush.msra.mxu0 0.0
  %215 = vmatpush.msra.mxu0 0.0
  %216 = vmatpush.msra.mxu0 0.0
  %217 = vmatpush.msra.mxu0 0.0
  %218 = vmatpush.msra.mxu0 0.0
  %219 = vmatpush.msra.mxu0 0.0
  %220 = vmatpush.msra.mxu0 0.0
  %221 = vmatpush.msra.mxu0 0.0
  %222 = vmatpush.msra.mxu0 0.0
  %223 = vmatpush.msra.mxu0 0.0
  %224 = vmatpush.msra.mxu0 %v82
  %225 = vmatpush.msra.mxu0 %v81
  %226 = vmatpush.msra.mxu0 %v80
  %227 = vmatpush.msra.mxu0 %v79
  %228 = vmatmul.f32.gmra.mxu0 %v210
  %v229 = vpop.f32.mrf.mxu0
  %v230 = vadd.f32 0.0, %v229
  %231 = vdwg.mxu0
  %v232 = vadd.f32 %v76, %v230
  %v233 = vtanh.pop %v232
  %v235 = vsel %vm83, %v233, 0
  %237 = vmatpush.msra.mxu0 0.0
  %238 = vmatpush.msra.mxu0 0.0
  %239 = vmatpush.msra.mxu0 0.0
  %240 = vmatpush.msra.mxu0 0.0
  %241 = vmatpush.msra.mxu0 0.0
  %242 = vmatpush.msra.mxu0 0.0
  %243 = vmatpush.msra.mxu0 0.0
  %244 = vmatpush.msra.mxu0 0.0
  %245 = vmatpush.msra.mxu0 0.0
  %246 = vmatpush.msra.mxu0 0.0
  %247 = vmatpush.msra.mxu0 0.0
  %248 = vmatpush.msra.mxu0 0.0
  %249 = vmatpush.msra.mxu0 %v82
  %250 = vmatpush.msra.mxu0 %v81
  %251 = vmatpush.msra.mxu0 %v80
  %252 = vmatpush.msra.mxu0 %v79
  %253 = vmatmul.f32.gmra.mxu0 %v235
  %v254 = vpop.f32.mrf.mxu0
  %v255 = vadd.f32 0.0, %v254
  %256 = vdwg.mxu0
  %v257 = vadd.f32 %v77, %v255
  %v258 = vtanh.pop %v257
  %v260 = vsel %vm83, %v258, 0
  %262 = vmatpush.msra.mxu0 0.0
  %263 = vmatpush.msra.mxu0 0.0
  %264 = vmatpush.msra.mxu0 0.0
  %265 = vmatpush.msra.mxu0 0.0
  %266 = vmatpush.msra.mxu0 0.0
  %267 = vmatpush.msra.mxu0 0.0
  %268 = vmatpush.msra.mxu0 0.0
  %269 = vmatpush.msra.mxu0 0.0
  %270 = vmatpush.msra.mxu0 0.0
  %271 = vmatpush.msra.mxu0 0.0
  %272 = vmatpush.msra.mxu0 0.0
  %273 = vmatpush.msra.mxu0 0.0
  %274 = vmatpush.msra.mxu0 %v82
  %275 = vmatpush.msra.mxu0 %v81
  %276 = vmatpush.msra.mxu0 %v80
  %277 = vmatpush.msra.mxu0 %v79
  %278 = vmatmul.f32.gmra.mxu0 %v260
  %v279 = vpop.f32.mrf.mxu0
  %v280 = vadd.f32 0.0, %v279
  %281 = vdwg.mxu0
  %v282 = vadd.f32 %v78, %v280
  %v283 = vtanh.pop %v282
  %v284 = vld [vmem:[%s1 + $0x22] sm:$0x1]
  %v285 = vld [vmem:[%s1 + $0x23] sm:$0x1]
  %v286 = vperm.slane %v284, 0
  %v287 = vmul.f32 %v283, %v286
  %v288 = vsel %vm83, %v287, 0.0
  %289 = vadd.xlane.f32.xlu0 %v288
  %v290 = vpop.xlane.xlu0 %289
  %v291 = vperm.slane %v285, 0
  %v292 = vadd.f32 %v290, %v291
  %vm293 = vcmask 7168
  %294 = vst.msk [vmem:[%s2] sm:$0xff] %vm293, %v292
  // Predicated region
  $region10: #{tpu_custom_call.1} parent=0 // pred_check
    _
  $region11: #{tpu_custom_call.1} parent=0 // pred_check_branch
    %296 = sbr.rel (0) target = $region13
  $region12: #{tpu_custom_call.1} parent=0 // pred_region
    _
  $region13: #{tpu_custom_call.1} parent=0 // pred_fallthru
    _
  // Predicated region
  $region14: #{tpu_custom_call.1} parent=0 // pred_check
    _
  $region15: #{tpu_custom_call.1} parent=0 // pred_check_branch
    %298 = sbr.rel (0) target = $region17
  $region16: #{tpu_custom_call.1} parent=0 // pred_region
    _
  $region17: #{tpu_custom_call.1} parent=0 // pred_fallthru
    _

</llo_original>
